<compile_context>
chip_gen: v7x
topology: tpu7x:2x2x1
jax: 0.10.0
libtpu: 0.0.40
codegen_flags: <defaults>
</compile_context>

<pallas_src>
import functools
import math

import jax
import jax.numpy as jnp
from jax.experimental import pallas as pl
from jax.experimental.pallas import tpu as pltpu


# ---------------------------------------------------------------------------
# Helpers
# ---------------------------------------------------------------------------
def _pick_row_tile(M, cap=256):
    """Largest row tile <= cap that divides M and is a multiple of 8; else full M."""
    if M <= cap:
        return M
    start = cap - (cap % 8)
    for t in range(start, 7, -8):
        if M % t == 0:
            return t
    return M


# ---------------------------------------------------------------------------
# Pallas kernels
# ---------------------------------------------------------------------------
def _linear_kernel(x_ref, w_ref, b_ref, o_ref, *, activation):
    x = x_ref[...].astype(jnp.bfloat16)
    w = w_ref[...].astype(jnp.bfloat16)
    y = jnp.dot(x, w, preferred_element_type=jnp.float32)
    y = y + b_ref[...]
    if activation == "gelu":
        # tanh-approx GELU (matches jax.nn.gelu approximate=True)
        y = 0.5 * y * (1.0 + jnp.tanh(0.7978845608028654 * (y + 0.044715 * y * y * y)))
    elif activation == "tanh":
        y = jnp.tanh(y)
    elif activation == "relu":
        y = jnp.maximum(y, 0.0)
    o_ref[...] = y.astype(o_ref.dtype)


def linear(x, w, b, activation="none"):
    """y = act(x @ w + b).  x: (M, K), w: (K, N), b: (N,) -> (M, N)."""
    M, K = x.shape
    N = w.shape[1]
    tm = _pick_row_tile(M)
    grid = (M // tm,)
    return pl.pallas_call(
        functools.partial(_linear_kernel, activation=activation),
        out_shape=jax.ShapeDtypeStruct((M, N), jnp.float32),
        grid=grid,
        in_specs=[
            pl.BlockSpec((tm, K), lambda i: (i, 0)),
            pl.BlockSpec((K, N), lambda i: (0, 0)),   # weight stays resident
            pl.BlockSpec((1, N), lambda i: (0, 0)),
        ],
        out_specs=pl.BlockSpec((tm, N), lambda i: (i, 0)),
        compiler_params=pltpu.CompilerParams(dimension_semantics=("parallel",)),
    )(x, w, b.reshape(1, N))


def _layernorm_kernel(*refs, eps, has_residual):
    if has_residual:
        x_ref, r_ref, g_ref, b_ref, o_ref = refs
        x = x_ref[...].astype(jnp.float32) + r_ref[...].astype(jnp.float32)
    else:
        x_ref, g_ref, b_ref, o_ref = refs
        x = x_ref[...].astype(jnp.float32)
    mean = jnp.mean(x, axis=-1, keepdims=True)
    var = jnp.mean((x - mean) ** 2, axis=-1, keepdims=True)
    y = (x - mean) * jax.lax.rsqrt(var + eps)
    o_ref[...] = (y * g_ref[...] + b_ref[...]).astype(o_ref.dtype)


def layernorm(x, g, b, residual=None, eps=1e-12):
    """LayerNorm(x [+ residual]).  x/residual: (M, H), g/b: (H,) -> (M, H)."""
    M, H = x.shape
    tm = _pick_row_tile(M)
    has_res = residual is not None

    in_specs = [pl.BlockSpec((tm, H), lambda i: (i, 0))]
    args = [x]
    if has_res:
        in_specs.append(pl.BlockSpec((tm, H), lambda i: (i, 0)))
        args.append(residual)
    in_specs += [
        pl.BlockSpec((1, H), lambda i: (0, 0)),
        pl.BlockSpec((1, H), lambda i: (0, 0)),
    ]
    args += [g.reshape(1, H), b.reshape(1, H)]

    return pl.pallas_call(
        functools.partial(_layernorm_kernel, eps=eps, has_residual=has_res),
        out_shape=jax.ShapeDtypeStruct((M, H), jnp.float32),
        grid=(M // tm,),
        in_specs=in_specs,
        out_specs=pl.BlockSpec((tm, H), lambda i: (i, 0)),
        compiler_params=pltpu.CompilerParams(dimension_semantics=("parallel",)),
    )(*args)


def _mha_kernel(qkv_ref, m_ref, ctx_ref, attn_ref, *, nh, dh, scale):
    """One batch element, all heads: fused QKV input, lane-dense ctx output."""
    qkv = qkv_ref[0].astype(jnp.float32)          # (S, 3H)
    m = m_ref[0]                                  # (1, S) additive mask
    H = nh * dh

    ctx_parts = []
    attn_parts = []
    for h in range(nh):                           # static unroll over heads
        qh = qkv[:, h * dh:(h + 1) * dh] * scale          # fold 1/sqrt(dh) into q
        kh = qkv[:, H + h * dh:H + (h + 1) * dh]
        vh = qkv[:, 2 * H + h * dh:2 * H + (h + 1) * dh]

        # q @ k^T expressed as a contraction (no materialized transpose)
        s = jax.lax.dot_general(
            qh.astype(jnp.bfloat16), kh.astype(jnp.bfloat16),
            (((1,), (1,)), ((), ())),
            preferred_element_type=jnp.float32)           # (S, S)
        s = s + m

        s_max = jnp.max(s, axis=-1, keepdims=True)
        p = jnp.exp(s - s_max)
        p = p / jnp.sum(p, axis=-1, keepdims=True)

        ctx_h = jnp.dot(p.astype(jnp.bfloat16), vh.astype(jnp.bfloat16),
                        preferred_element_type=jnp.float32)  # (S, dh)
        ctx_parts.append(ctx_h)
        attn_parts.append(p[None])                # (1, S, S)

    ctx_ref[0] = jnp.concatenate(ctx_parts, axis=-1).astype(ctx_ref.dtype)   # (S, H)
    attn_ref[0] = jnp.concatenate(attn_parts, axis=0).astype(attn_ref.dtype)  # (nh, S, S)


def multihead_attention(qkv, add_mask, nh, dh):
    """qkv: (B, S, 3H); add_mask: (B, 1, S) -> ctx (B, S, H), probs (B, nh, S, S)."""
    B, S, threeH = qkv.shape
    H = threeH // 3
    scale = 1.0 / math.sqrt(dh)
    return pl.pallas_call(
        functools.partial(_mha_kernel, nh=nh, dh=dh, scale=scale),
        out_shape=(
            jax.ShapeDtypeStruct((B, S, H), jnp.float32),
            jax.ShapeDtypeStruct((B, nh, S, S), jnp.float32),
        ),
        grid=(B,),
        in_specs=[
            pl.BlockSpec((1, S, threeH), lambda b: (b, 0, 0)),
            pl.BlockSpec((1, 1, S), lambda b: (b, 0, 0)),
        ],
        out_specs=[
            pl.BlockSpec((1, S, H), lambda b: (b, 0, 0)),
            pl.BlockSpec((1, nh, S, S), lambda b: (b, 0, 0, 0)),
        ],
        compiler_params=pltpu.CompilerParams(dimension_semantics=("parallel",)),
    )(qkv, add_mask)


def _head_kernel(cls_ref, wp_ref, bp_ref, wr_ref, br_ref, u_ref, o_ref, *,
                 drop_p, train):
    """Fused: pooled = tanh(cls @ Wp + bp); dropout(pooled); out = pooled @ Wr + br."""
    x = cls_ref[...].astype(jnp.bfloat16)
    pooled = jnp.tanh(
        jnp.dot(x, wp_ref[...].astype(jnp.bfloat16),
                preferred_element_type=jnp.float32) + bp_ref[...])
    if train and drop_p > 0.0:
        keep = u_ref[...] >= drop_p
        pooled = jnp.where(keep, pooled * (1.0 / (1.0 - drop_p)), 0.0)
    y = jnp.dot(pooled.astype(jnp.bfloat16), wr_ref[...].astype(jnp.bfloat16),
                preferred_element_type=jnp.float32) + br_ref[...]
    o_ref[...] = y.astype(o_ref.dtype)


def pooler_dropout_reg_head(cls, wp, bp, wr, br, drop_u, drop_p=0.5, train=True):
    """cls: (B, H) -> (B, 1)."""
    B, H = cls.shape
    return pl.pallas_call(
        functools.partial(_head_kernel, drop_p=drop_p, train=train),
        out_shape=jax.ShapeDtypeStruct((B, 1), jnp.float32),
    )(cls, wp, bp.reshape(1, H), wr, br.reshape(1, 1), drop_u)


# ---------------------------------------------------------------------------
# Model (glue in plain JAX, hot paths in Pallas)
# ---------------------------------------------------------------------------
def init_params(key, *, vocab=50, max_pos=16, type_vocab=2, hidden=32,
                n_layers=2, n_heads=4, ffn=64):
    # TODO(synk): pretrained ALBERT/BERT weights (AutoModel.from_pretrained)
    #             cannot be loaded here; deterministic random init stands in.
    std = 0.02
    ks = iter(jax.random.split(key, 64))
    n = lambda shape: std * jax.random.normal(next(ks), shape, jnp.float32)
    p = {
        "tok_emb": n((vocab, hidden)),
        "pos_emb": n((max_pos, hidden)),
        "type_emb": n((type_vocab, hidden)),
        "emb_ln_g": jnp.ones((hidden,), jnp.float32),
        "emb_ln_b": jnp.zeros((hidden,), jnp.float32),
        "pooler_w": n((hidden, hidden)),
        "pooler_b": jnp.zeros((hidden,), jnp.float32),
        "reg_w": n((hidden, 1)),
        "reg_b": jnp.zeros((1,), jnp.float32),
        "layers": [],
    }
    for _ in range(n_layers):
        p["layers"].append({
            "wqkv": n((hidden, 3 * hidden)),
            "bqkv": jnp.zeros((3 * hidden,), jnp.float32),
            "wo": n((hidden, hidden)), "bo": jnp.zeros((hidden,), jnp.float32),
            "ln1_g": jnp.ones((hidden,), jnp.float32),
            "ln1_b": jnp.zeros((hidden,), jnp.float32),
            "w1": n((hidden, ffn)), "b1": jnp.zeros((ffn,), jnp.float32),
            "w2": n((ffn, hidden)), "b2": jnp.zeros((hidden,), jnp.float32),
            "ln2_g": jnp.ones((hidden,), jnp.float32),
            "ln2_b": jnp.zeros((hidden,), jnp.float32),
        })
    p["n_heads"] = n_heads
    p["hidden"] = hidden
    return p


def sentence_pair_classifier_forward(params, input_ids, attn_masks,
                                     token_type_ids, *, dropout_seed=0,
                                     train=True):
    """Returns (output, attentions) like the PyTorch module."""
    B, S = input_ids.shape
    H = params["hidden"]
    nh = params["n_heads"]
    dh = H // nh

    # --- embeddings (gather is glue) ---
    x = (jnp.take(params["tok_emb"], input_ids, axis=0)
         + params["pos_emb"][:S][None, :, :]
         + jnp.take(params["type_emb"], token_type_ids, axis=0))
    x2d = layernorm(x.reshape(B * S, H), params["emb_ln_g"], params["emb_ln_b"])

    # additive attention mask per batch element: (B, 1, S)
    add_mask = ((1.0 - attn_masks.astype(jnp.float32)) * -1e9).reshape(B, 1, S)

    attentions = []
    for lyr in params["layers"]:
        # fused Q/K/V projection: one matmul, lane-dense 3H output
        qkv = linear(x2d, lyr["wqkv"], lyr["bqkv"])                 # (B*S, 3H)
        ctx, probs = multihead_attention(qkv.reshape(B, S, 3 * H), add_mask, nh, dh)
        attentions.append(probs)                                    # (B, nh, S, S)

        attn_out = linear(ctx.reshape(B * S, H), lyr["wo"], lyr["bo"])
        x2d = layernorm(attn_out, lyr["ln1_g"], lyr["ln1_b"], residual=x2d)

        ff = linear(x2d, lyr["w1"], lyr["b1"], activation="gelu")
        ff = linear(ff, lyr["w2"], lyr["b2"])
        x2d = layernorm(ff, lyr["ln2_g"], lyr["ln2_b"], residual=x2d)

    x = x2d.reshape(B, S, H)

    # --- pooler(tanh) + dropout(p=0.5) + Linear(hidden, 1) fused in one kernel ---
    cls = x[:, 0, :]                                                # (B, H)
    # TODO(synk): dropout mask uses jax.random on host (TPU HW PRNG primitive is
    #             unavailable in interpret mode); semantics (keep-prob, 1/(1-p)
    #             rescale) match torch.nn.Dropout.
    drop_u = jax.random.uniform(jax.random.PRNGKey(dropout_seed), (B, H),
                                dtype=jnp.float32)
    output = pooler_dropout_reg_head(cls, params["pooler_w"], params["pooler_b"],
                                     params["reg_w"], params["reg_b"],
                                     drop_u, drop_p=0.5, train=train)

    return output, tuple(attentions)


# ---------------------------------------------------------------------------
if __name__ == "__main__":
    B, S, H, NH, L = 2, 8, 32, 4, 2

    key = jax.random.PRNGKey(0)
    k_params, k_ids = jax.random.split(key)
    params = init_params(k_params, vocab=50, max_pos=16, type_vocab=2,
                         hidden=H, n_layers=L, n_heads=NH, ffn=64)

    input_ids = jax.random.randint(k_ids, (B, S), 0, 50, dtype=jnp.int32)
    attn_masks = jnp.ones((B, S), jnp.int32).at[1, S - 2:].set(0)   # some padding
    token_type_ids = jnp.concatenate(
        [jnp.zeros((B, S // 2), jnp.int32), jnp.ones((B, S // 2), jnp.int32)], axis=1)

    output, attentions = sentence_pair_classifier_forward(
        params, input_ids, attn_masks, token_type_ids, dropout_seed=0, train=True)

    jax.block_until_ready(output)
    jax.block_until_ready(attentions)

    assert output.shape == (B, 1)
    assert len(attentions) == L and attentions[0].shape == (B, NH, S, S)
    assert bool(jnp.all(jnp.isfinite(output)))
    print("KERNEL_OK")
</pallas_src>

<mosaic_0001>
module attributes {stable_mosaic.version = 11 : i64} {
  func.func @_layernorm_kernel(%arg0: i32, %arg1: memref<16x32xf32, #tpu.memory_space<vmem>>, %arg2: memref<1x32xf32, #tpu.memory_space<vmem>>, %arg3: memref<1x32xf32, #tpu.memory_space<vmem>>, %arg4: memref<16x32xf32, #tpu.memory_space<vmem>>) attributes {dimension_semantics = [#tpu.dimension_semantics<parallel>], iteration_bounds = array<i64: 1>, scalar_prefetch = 0 : i64, scratch_operands = 0 : i64, tpu.core_type = #tpu.core_type<tc>, window_params = [{transform_indices = @transform_0, window_bounds = array<i64: 16, 32>}, {pipeline_mode = #tpu.pipeline_mode<synchronous>, transform_indices = @transform_1, window_bounds = array<i64: 1, 32>}, {pipeline_mode = #tpu.pipeline_mode<synchronous>, transform_indices = @transform_2, window_bounds = array<i64: 1, 32>}, {transform_indices = @transform_3, window_bounds = array<i64: 16, 32>}]} {
    %c0 = arith.constant 0 : index
    %c0_0 = arith.constant 0 : index
    %0 = vector.load %arg1[%c0, %c0_0] : memref<16x32xf32, #tpu.memory_space<vmem>>, vector<16x32xf32>
    %cst = arith.constant dense<0.000000e+00> : vector<16xf32>
    %1 = vector.multi_reduction <add>, %0, %cst [1] : vector<16x32xf32> to vector<16xf32>
    %2 = vector.shape_cast %1 : vector<16xf32> to vector<16x1xf32>
    %cst_1 = arith.constant 3.200000e+01 : f32
    %3 = vector.broadcast %cst_1 : f32 to vector<16x1xf32>
    %4 = arith.divf %2, %3 : vector<16x1xf32>
    %5 = vector.broadcast %4 : vector<16x1xf32> to vector<16x32xf32>
    %6 = arith.subf %0, %5 : vector<16x32xf32>
    %7 = arith.mulf %6, %6 : vector<16x32xf32>
    %cst_2 = arith.constant dense<0.000000e+00> : vector<16xf32>
    %8 = vector.multi_reduction <add>, %7, %cst_2 [1] : vector<16x32xf32> to vector<16xf32>
    %9 = vector.shape_cast %8 : vector<16xf32> to vector<16x1xf32>
    %cst_3 = arith.constant 3.200000e+01 : f32
    %10 = vector.broadcast %cst_3 : f32 to vector<16x1xf32>
    %11 = arith.divf %9, %10 : vector<16x1xf32>
    %12 = vector.broadcast %4 : vector<16x1xf32> to vector<16x32xf32>
    %13 = arith.subf %0, %12 : vector<16x32xf32>
    %cst_4 = arith.constant 9.99999996E-13 : f32
    %14 = vector.broadcast %cst_4 : f32 to vector<16x1xf32>
    %15 = arith.addf %11, %14 : vector<16x1xf32>
    %16 = math.rsqrt %15 : vector<16x1xf32>
    %17 = vector.broadcast %16 : vector<16x1xf32> to vector<16x32xf32>
    %18 = arith.mulf %13, %17 : vector<16x32xf32>
    %c0_5 = arith.constant 0 : index
    %c0_6 = arith.constant 0 : index
    %19 = vector.load %arg2[%c0_5, %c0_6] : memref<1x32xf32, #tpu.memory_space<vmem>>, vector<1x32xf32>
    %20 = vector.broadcast %19 : vector<1x32xf32> to vector<16x32xf32>
    %21 = arith.mulf %18, %20 : vector<16x32xf32>
    %c0_7 = arith.constant 0 : index
    %c0_8 = arith.constant 0 : index
    %22 = vector.load %arg3[%c0_7, %c0_8] : memref<1x32xf32, #tpu.memory_space<vmem>>, vector<1x32xf32>
    %23 = vector.broadcast %22 : vector<1x32xf32> to vector<16x32xf32>
    %24 = arith.addf %21, %23 : vector<16x32xf32>
    %c0_9 = arith.constant 0 : index
    %c0_10 = arith.constant 0 : index
    %25 = vector.load %arg4[%c0_9, %c0_10] : memref<16x32xf32, #tpu.memory_space<vmem>>, vector<16x32xf32>
    tpu.vector_store %arg4[%c0_9, %c0_10], %24 {strides = array<i32>} : memref<16x32xf32, #tpu.memory_space<vmem>>, vector<16x32xf32>,
    return
  }
  func.func @transform_0(%arg0: i32) -> (i32, i32) {
    %c0_i32 = arith.constant 0 : i32
    %c0_i32_0 = arith.constant 0 : i32
    return %arg0, %c0_i32 : i32, i32
  }
  func.func @transform_1(%arg0: i32) -> (i32, i32) {
    %c0_i32 = arith.constant 0 : i32
    %c0_i32_0 = arith.constant 0 : i32
    %c0_i32_1 = arith.constant 0 : i32
    return %c0_i32, %c0_i32_0 : i32, i32
  }
  func.func @transform_2(%arg0: i32) -> (i32, i32) {
    %c0_i32 = arith.constant 0 : i32
    %c0_i32_0 = arith.constant 0 : i32
    %c0_i32_1 = arith.constant 0 : i32
    return %c0_i32, %c0_i32_0 : i32, i32
  }
  func.func @transform_3(%arg0: i32) -> (i32, i32) {
    %c0_i32 = arith.constant 0 : i32
    %c0_i32_0 = arith.constant 0 : i32
    return %arg0, %c0_i32 : i32, i32
  }
}

</mosaic_0001>

<llo_original>
// kernel: tpu_custom_call.1
$region0: #{tpu_custom_call.1}
  #allocation0 [shape = 'u32[]', space=smem, size = 0x4, offset = 0x4, fixed_abs, tag = 'smem constant byte address 0x4 - core index']
  #allocation1 [shape = 'u32[144,128]{1,0:T(1,128)}', space=vmem, size = 0x12000, scoped, tag = 'internal scratch']
  %s0 = inlined_call_operand.hbm [shape: f32[16,32], index: 0, kind: input, shape index: {}]
  %s1 = inlined_call_operand.vmem [shape: f32[1,32], index: 1, kind: input, shape index: {}]
  %s2 = inlined_call_operand.vmem [shape: f32[1,32], index: 2, kind: input, shape index: {}]
  %s3 = inlined_call_operand.hbm [shape: f32[16,32], index: 3, kind: output, shape index: {}]
  %s4 = sld [smem:[#allocation0]]
  $region26: #{tpu_custom_call.1} parent=0
    _
  %s6 = ssub.s32 1, %s4
  %s7 = scalar_select 0, %s6, %s4
  $region1: #{tpu_custom_call.1} parent=0
    #allocation2 [shape = 'u8[8192]{0}', space=vmem, size = 0x2000, scoped, tag = 'input window, operand 0, single buffered']
    #allocation3 [shape = 's32[1]{0}', space=sflag, size = 0x4, scoped, tag = 'scoped memory for tpu_custom_call.1']
    #allocation4 [shape = 's32[1]{0}', space=sflag, size = 0x4, scoped, tag = 'scoped memory for tpu_custom_call.1']
    #allocation5 [shape = 'u8[8192]{0}', space=vmem, size = 0x2000, scoped, tag = 'output window, operand 0, single buffered']
    %8 = vsyncpa [#allocation3], 0
    %9 = vsyncpa [#allocation4], 0
    // Predicated region
    $region2: #{tpu_custom_call.1} parent=1 // pred_check
      _
    $region3: #{tpu_custom_call.1} parent=1 // pred_check_branch
      %11 = sbr.rel (0) target = $region5
    $region4: #{tpu_custom_call.1} parent=1 // pred_region
      %s13 = ssub.s32 256, 256
      %14 = vsyncadd [#allocation3], %s13
      %s15 = sshll.u32 [#allocation2], 4
      %s16 = int_to_ptr.vmem [resolvable:$true] %s15
      %21 = dma.hbm_to_vmem [thread:$0]  %s0, 256, %s16, [#allocation3], 128, 128, 8
    $region5: #{tpu_custom_call.1} parent=1 // pred_fallthru
      _
    // Predicated region
    $region6: #{tpu_custom_call.1} parent=1 // pred_check
      _
    $region7: #{tpu_custom_call.1} parent=1 // pred_check_branch
      %23 = sbr.rel (0) target = $region9
    $region8: #{tpu_custom_call.1} parent=1 // pred_region
      _
    $region9: #{tpu_custom_call.1} parent=1 // pred_fallthru
      _
    // Predicated region
    $region10: #{tpu_custom_call.1} parent=1 // pred_check
      _
    $region11: #{tpu_custom_call.1} parent=1 // pred_check_branch
      %25 = sbr.rel (0) target = $region13
    $region12: #{tpu_custom_call.1} parent=1 // pred_region
      _
    $region13: #{tpu_custom_call.1} parent=1 // pred_fallthru
      _
    // Predicated region
    $region14: #{tpu_custom_call.1} parent=1 // pred_check
      _
    $region15: #{tpu_custom_call.1} parent=1 // pred_check_branch
      %27 = sbr.rel (0) target = $region17
    $region16: #{tpu_custom_call.1} parent=1 // pred_region
      %28 = dma.done [#allocation3], 256
    $region17: #{tpu_custom_call.1} parent=1 // pred_fallthru
      _
    %v29 = vld [vmem:[#allocation2] sm:$0xff]
    %v30 = vld [vmem:[#allocation2 + $0x8] sm:$0xff]
    %vm31 = vcmask 261120
    %v32 = vsel %vm31, %v29, 0.0
    %33 = vadd.xlane.f32.xlu0 %v32
    %v34 = vpop.xlane.xlu0 %33
    %v35 = vsel %vm31, %v30, 0.0
    %36 = vadd.xlane.f32.xlu0 %v35
    %v37 = vpop.xlane.xlu0 %36
    %v38 = vrcp.pop 32.0
    %v39 = vmul.f32 %v34, %v38
    %v40 = vmul.f32 %v37, %v38
    %v41 = vsub.f32 %v29, %v39
    %v42 = vsub.f32 %v30, %v40
    %v43 = vmul.f32 %v41, %v41
    %v44 = vmul.f32 %v42, %v42
    %v45 = vsel %vm31, %v43, 0.0
    %46 = vadd.xlane.f32.xlu0 %v45
    %v47 = vpop.xlane.xlu0 %46
    %v48 = vsel %vm31, %v44, 0.0
    %49 = vadd.xlane.f32.xlu0 %v48
    %v50 = vpop.xlane.xlu0 %49
    %v51 = vmul.f32 %v47, %v38
    %v52 = vmul.f32 %v50, %v38
    %v53 = vadd.f32 %v51, 1e-12
    %v54 = vadd.f32 %v52, 1e-12
    %v55 = vrsqrt.pop %v53
    %v56 = vrsqrt.pop %v54
    %v57 = vmul.f32 %v41, %v55
    %v58 = vmul.f32 %v42, %v56
    %v59 = vld [vmem:[%s1] sm:$0x1]
    %v61 = vlaneseq
    %v62 = vshrl.u32 %v61, 7
    %v63 = vsub.s32 0, %v62
    %v64 = vrot.slane %v59, %v63
    %v66 = vmul.f32 %v57, %v64
    %v67 = vmul.f32 %v58, %v64
    %v68 = vld [vmem:[%s2] sm:$0x1]
    %v70 = vlaneseq
    %v71 = vshrl.u32 %v70, 7
    %v72 = vsub.s32 0, %v71
    %v73 = vrot.slane %v68, %v72
    %v75 = vadd.f32 %v66, %v73
    %v76 = vadd.f32 %v67, %v73
    %77 = vst.msk [vmem:[#allocation5] sm:$0xff] %vm31, %v75
    %78 = vst.msk [vmem:[#allocation5 + $0x8] sm:$0xff] %vm31, %v76
    // Predicated region
    $region18: #{tpu_custom_call.1} parent=1 // pred_check
      _
    $region19: #{tpu_custom_call.1} parent=1 // pred_check_branch
      %80 = sbr.rel (0) target = $region21
    $region20: #{tpu_custom_call.1} parent=1 // pred_region
      %s82 = ssub.s32 256, 256
      %83 = vsyncadd [#allocation4], %s82
      %s84 = sshll.u32 [#allocation5], 4
      %s85 = int_to_ptr.vmem [resolvable:$true] %s84
      %90 = dma.vmem_to_hbm [thread:$0]  %s85, 256, %s3, [#allocation4], 128, 128, 8
    $region21: #{tpu_custom_call.1} parent=1 // pred_fallthru
      _
    // Predicated region
    $region22: #{tpu_custom_call.1} parent=1 // pred_check
      _
    $region23: #{tpu_custom_call.1} parent=1 // pred_check_branch
      %92 = sbr.rel (0) target = $region25
    $region24: #{tpu_custom_call.1} parent=1 // pred_region
      %93 = dma.done [#allocation4], 256
    $region25: #{tpu_custom_call.1} parent=1 // pred_fallthru
      _
    %94 = vsyncpa [#allocation3], 1
    %95 = vsyncpa [#allocation4], 1

</llo_original>
